<compile_context>
chip_gen: v6e
topology: v6e:2x2x1
jax: 0.10.0
libtpu: 0.0.40
codegen_flags: <defaults>
</compile_context>

<pallas_src>
import functools

import numpy as np
import jax
import jax.numpy as jnp
from jax.experimental import pallas as pl
from jax.experimental.pallas import tpu as pltpu  # noqa: F401  (kept for parity / future grid use)


# ----------------------------------------------------------------------------
# Fused forward kernel
# ----------------------------------------------------------------------------
def _sigmoid(x):
    # numerically stable sigmoid via tanh (EUP), avoids exp(-x) overflow.
    return 0.5 * (jnp.tanh(0.5 * x) + 1.0)


def _fused_kernel(xe_ref, xr_ref, ehr_ref, qe_ref, qr_ref, we_ref, misc_ref,
                  out_ref, *, E):
    f32, bf16 = jnp.float32, jnp.bfloat16

    # packed small parameters (one DMA): rows of the (8, 2H) misc slab
    ce     = misc_ref[0:1, :]          # ecc-stream folded offset         (1, 2H)
    cr     = misc_ref[1:2, :]          # err-stream folded offset         (1, 2H)
    wat    = misc_ref[2:3, :]          # attention-score weight           (1, 2H)
    wf2a   = misc_ref[3:4, :]          # fc2 weight, fused part           (1, 2H)
    behr   = misc_ref[4:5, :E]         # ehr_proj bias                    (1, E)
    wf2b   = misc_ref[5:6, :E]         # fc2 weight, ehr part             (1, E)
    attn_b = misc_ref[6:7, 0:1]        # attention-score bias             (1, 1)
    fc2_b  = misc_ref[7:8, 0:1]        # fc2 bias                         (1, 1)

    # Fully-folded per-stream linear chains: one MXU dot each (K=V*T, N=2H).
    eg = jnp.dot(xe_ref[...].astype(bf16), qe_ref[...],
                 preferred_element_type=f32) + ce                   # (B, 2H)
    rg = jnp.dot(xr_ref[...].astype(bf16), qr_ref[...],
                 preferred_element_type=f32) + cr                   # (B, 2H)

    # Gated fusion head.  N=1 outputs -> VPU multiply + lane reduce, not 1-col matmuls.
    attn = _sigmoid(jnp.sum(jnp.tanh(eg + rg) * wat, axis=-1, keepdims=True)
                    + attn_b)                                       # (B, 1)
    fused = attn * eg + (1.0 - attn) * rg                           # (B, 2H)

    # EHR projection (tiny K=ehr_dim dot) + ReLU (Dropout = identity in eval mode).
    ehr_p = jnp.maximum(
        jnp.dot(ehr_ref[...], we_ref[...], preferred_element_type=f32) + behr,
        0.0)                                                        # (B, E)

    # fc2 on relu(concat(fused, ehr_p)); relu(ehr_p) == ehr_p.
    xa = jnp.maximum(fused, 0.0)
    logit = (jnp.sum(xa * wf2a, axis=-1, keepdims=True)
             + jnp.sum(ehr_p * wf2b, axis=-1, keepdims=True)
             + fc2_b)                                               # (B, 1)
    out_ref[...] = _sigmoid(logit)


# ----------------------------------------------------------------------------
# Host-side (numpy, float64) constant folding -- run ONCE per parameter set
# ----------------------------------------------------------------------------
def _fold_stream(conv_w, conv_b, w0, w1, gcn_b, proj_w, proj_b, lhat, C, T):
    """Fold conv -> flatten -> ChebConv(K=2) -> node-flattened projection into
    eg = x.reshape(B, V*T) @ Q + c  (exact algebra, float64)."""
    conv_w = np.asarray(conv_w, np.float64)        # (C, 3)
    conv_b = np.asarray(conv_b, np.float64)        # (C,)
    w0 = np.asarray(w0, np.float64)                # (C*T, G)
    w1 = np.asarray(w1, np.float64)                # (C*T, G)
    gcn_b = np.asarray(gcn_b, np.float64)          # (G,)
    proj_w = np.asarray(proj_w, np.float64)        # (V*G, 2H)
    proj_b = np.asarray(proj_b, np.float64)        # (2H,)
    lhat = np.asarray(lhat, np.float64)            # (V, V)
    V = lhat.shape[0]
    G = w0.shape[1]
    H2 = proj_w.shape[1]

    # Conv1d(1->C,k=3,pad=1) + (c*T+t) flatten as a (C*T, T) matrix + bias vector.
    cmat = np.zeros((C, T, T))
    for k in range(3):
        cmat += conv_w[:, k][:, None, None] * np.eye(T, k=k - 1)
    cmat = cmat.reshape(C * T, T)
    bias_vec = np.repeat(conv_b, T)                # (C*T,)

    w0f = cmat.T @ w0                              # (T, G)
    w1f = cmat.T @ w1                              # (T, G)
    b0 = bias_vec @ w0                             # (G,)
    b1 = bias_vec @ w1                             # (G,)

    wp = proj_w.reshape(V, G, H2)                  # per-node projection blocks
    lwp = np.einsum("vu,vgh->ugh", lhat, wp)       # sum_v Lhat[v,u] * wp[v]

    q = (np.einsum("tg,ugh->uth", w0f, wp)
         + np.einsum("tg,ugh->uth", w1f, lwp)).reshape(V * T, H2)   # (V*T, 2H)

    rowsum = lhat.sum(axis=1)                      # (V,)
    s = wp.sum(axis=0)                             # (G, 2H)
    sr = np.einsum("v,vgh->gh", rowsum, wp)        # (G, 2H)
    c = b0 @ s + b1 @ sr + gcn_b @ s + proj_b      # (2H,)
    return q, c


def fold_params(params, lhat_ecc, lhat_err, temporal_out, tf_num):
    """Precompute kernel operands (host, float64).  Returns (kernel_params, f64_debug)."""
    C, T = temporal_out, tf_num
    H2 = params["ecc_proj_w"].shape[1]
    E = params["ehr_w"].shape[1]
    assert E <= H2, "misc packing assumes ehr_out <= 2*hidden_size"

    qe, ce = _fold_stream(params["conv_ecc_w"], params["conv_ecc_b"],
                          params["gcn_ecc_w0"], params["gcn_ecc_w1"],
                          params["gcn_ecc_b"], params["ecc_proj_w"],
                          params["ecc_proj_b"], lhat_ecc, C, T)
    qr, cr = _fold_stream(params["conv_err_w"], params["conv_err_b"],
                          params["gcn_err_w0"], params["gcn_err_w1"],
                          params["gcn_err_b"], params["err_proj_w"],
                          params["err_proj_b"], lhat_err, C, T)

    attn_w = np.asarray(params["attn_w"], np.float64).reshape(-1)    # (2H,)
    fc2_w = np.asarray(params["fc2_w"], np.float64).reshape(-1)      # (2H + E,)
    misc = np.zeros((8, H2))
    misc[0] = ce
    misc[1] = cr
    misc[2] = attn_w
    misc[3] = fc2_w[:H2]
    misc[4, :E] = np.asarray(params["ehr_b"], np.float64)
    misc[5, :E] = fc2_w[H2:]
    misc[6, 0] = float(np.asarray(params["attn_b"]).reshape(-1)[0])
    misc[7, 0] = float(np.asarray(params["fc2_b"]).reshape(-1)[0])

    kernel_params = {
        "qe": jnp.asarray(qe, jnp.bfloat16),       # dominant weights in bf16
        "qr": jnp.asarray(qr, jnp.bfloat16),
        "ehr_w": jnp.asarray(params["ehr_w"], jnp.float32),
        "misc": jnp.asarray(misc, jnp.float32),
    }
    dbg = {"qe64": qe, "ce64": ce, "qr64": qr, "cr64": cr}
    return kernel_params, dbg


# ----------------------------------------------------------------------------
# jit-able forward wrapper (only free reshapes + the single pallas_call)
# ----------------------------------------------------------------------------
def dual_stgcn_forward(kparams, ecc, err, ehr):
    B = ecc.shape[0]
    xe = ecc.reshape(B, -1)            # (B, V_ecc*T); row index v*T+t matches Q rows
    xr = err.reshape(B, -1)            # (B, V_err*T)
    E = kparams["ehr_w"].shape[1]
    # TODO(synk): nn.Dropout omitted (inference mode).  If B ever grows, add a
    # batch grid with dimension_semantics=("parallel",) to use v7x's 2nd TC.
    return pl.pallas_call(
        functools.partial(_fused_kernel, E=E),
        out_shape=jax.ShapeDtypeStruct((B, 1), jnp.float32),
    )(xe, xr, ehr, kparams["qe"], kparams["qr"], kparams["ehr_w"], kparams["misc"])


# ----------------------------------------------------------------------------
# Graph setup (dense scaled Laplacian, Lhat = -D^{-1/2} A D^{-1/2}, lambda_max=2)
# ----------------------------------------------------------------------------
def ring_edge_index(n):
    src, dst = [], []
    for i in range(n):
        j = (i + 1) % n
        src += [i, j]
        dst += [j, i]
    return np.asarray(src, np.int64), np.asarray(dst, np.int64)


def build_lhat(src, dst, n):
    w = np.ones(src.shape[0])
    deg = np.zeros(n)
    np.add.at(deg, src, w)
    dinv = np.where(deg > 0, 1.0 / np.sqrt(deg), 0.0)
    lhat = np.zeros((n, n))
    np.add.at(lhat, (dst, src), -dinv[src] * w * dinv[dst])
    return lhat


# ----------------------------------------------------------------------------
# References for validation
# ----------------------------------------------------------------------------
def _np_sigmoid(x):
    return 1.0 / (1.0 + np.exp(-x))


def reference_np(params, ecc, err, ehr, lhat_ecc, lhat_err):
    """Unfolded PyTorch-semantics forward, numpy float64 (exact)."""
    p = {k: np.asarray(v, np.float64) for k, v in params.items()}
    ecc = np.asarray(ecc, np.float64)
    err = np.asarray(err, np.float64)
    ehr = np.asarray(ehr, np.float64)

    def conv(x, w, b):
        B, V, T = x.shape
        xp = np.pad(x.reshape(B * V, T), ((0, 0), (1, 1)))
        taps = np.stack([xp[:, k:k + T] for k in range(3)], axis=1)      # (R,3,T)
        out = np.einsum("rkt,ck->rct", taps, w) + b[None, :, None]       # (R,C,T)
        return out.reshape(B, V, -1)                                     # c*T + t

    def gcn(f, lhat, w0, w1, b):
        lx = np.einsum("ij,bjf->bif", lhat, f)
        return (np.einsum("bvf,fg->bvg", f, w0)
                + np.einsum("bvf,fg->bvg", lx, w1) + b)

    fe = conv(ecc, p["conv_ecc_w"], p["conv_ecc_b"])
    fr = conv(err, p["conv_err_w"], p["conv_err_b"])
    eo = gcn(fe, lhat_ecc, p["gcn_ecc_w0"], p["gcn_ecc_w1"], p["gcn_ecc_b"])
    ro = gcn(fr, lhat_err, p["gcn_err_w0"], p["gcn_err_w1"], p["gcn_err_b"])
    B = ecc.shape[0]
    eg = eo.reshape(B, -1) @ p["ecc_proj_w"] + p["ecc_proj_b"]
    rg = ro.reshape(B, -1) @ p["err_proj_w"] + p["err_proj_b"]
    attn = _np_sigmoid(np.tanh(eg + rg) @ p["attn_w"] + p["attn_b"])
    fused = attn * eg + (1.0 - attn) * rg
    ehr_p = np.maximum(ehr @ p["ehr_w"] + p["ehr_b"], 0.0)
    x = np.maximum(np.concatenate([fused, ehr_p], axis=1), 0.0)
    return _np_sigmoid(x @ p["fc2_w"] + p["fc2_b"])


def folded_np(dbg, params, ecc, err, ehr):
    """Folded math, numpy float64 -- proves the fold is algebraically exact."""
    p = {k: np.asarray(v, np.float64) for k, v in params.items()}
    B = ecc.shape[0]
    xe = np.asarray(ecc, np.float64).reshape(B, -1)
    xr = np.asarray(err, np.float64).reshape(B, -1)
    eh = np.asarray(ehr, np.float64)
    H2 = p["ecc_proj_w"].shape[1]
    eg = xe @ dbg["qe64"] + dbg["ce64"]
    rg = xr @ dbg["qr64"] + dbg["cr64"]
    attn = _np_sigmoid(np.tanh(eg + rg) @ p["attn_w"] + p["attn_b"])
    fused = attn * eg + (1.0 - attn) * rg
    ehr_p = np.maximum(eh @ p["ehr_w"] + p["ehr_b"], 0.0)
    logit = (np.maximum(fused, 0.0) @ p["fc2_w"][:H2]
             + ehr_p @ p["fc2_w"][H2:] + p["fc2_b"])
    return _np_sigmoid(logit)


def folded_jnp(kparams, ecc, err, ehr):
    """Folded math in plain jnp with the SAME (bf16 weight / f32 acc) numerics as
    the kernel -- tight correctness reference for the pallas_call."""
    f32, bf16 = jnp.float32, jnp.bfloat16
    B = ecc.shape[0]
    misc = kparams["misc"]
    E = kparams["ehr_w"].shape[1]
    eg = jnp.dot(ecc.reshape(B, -1).astype(bf16), kparams["qe"],
                 preferred_element_type=f32) + misc[0:1]
    rg = jnp.dot(err.reshape(B, -1).astype(bf16), kparams["qr"],
                 preferred_element_type=f32) + misc[1:2]
    attn = _sigmoid(jnp.sum(jnp.tanh(eg + rg) * misc[2:3], -1, keepdims=True)
                    + misc[6, 0])
    fused = attn * eg + (1.0 - attn) * rg
    ehr_p = jnp.maximum(jnp.dot(ehr, kparams["ehr_w"],
                                preferred_element_type=f32) + misc[4:5, :E], 0.0)
    logit = (jnp.sum(jnp.maximum(fused, 0.0) * misc[3:4], -1, keepdims=True)
             + jnp.sum(ehr_p * misc[5:6, :E], -1, keepdims=True) + misc[7, 0])
    return _sigmoid(logit)


# ----------------------------------------------------------------------------
if __name__ == "__main__":
    # module hyper-params (defaults of DualSTGCN_w_EHR, gated fusion)
    B = 2
    aha_num, tf_num = 16, 25
    V_ecc, V_err = aha_num, aha_num - 4
    temporal_out, gcn_out, hidden_size = 32, 64, 128
    ehr_dim, ehr_out = 10, 64
    F_in = temporal_out * tf_num                        # 800

    key = jax.random.PRNGKey(0)
    ks = jax.random.split(key, 24)

    def w(k, shape, scale=0.1):
        return (scale * jax.random.normal(k, shape)).astype(jnp.float32)

    params = {
        "conv_ecc_w": w(ks[0], (temporal_out, 3)),
        "conv_ecc_b": w(ks[1], (temporal_out,)),
        "conv_err_w": w(ks[2], (temporal_out, 3)),
        "conv_err_b": w(ks[3], (temporal_out,)),
        "gcn_ecc_w0": w(ks[4], (F_in, gcn_out)),
        "gcn_ecc_w1": w(ks[5], (F_in, gcn_out)),
        "gcn_ecc_b":  w(ks[6], (gcn_out,)),
        "gcn_err_w0": w(ks[7], (F_in, gcn_out)),
        "gcn_err_w1": w(ks[8], (F_in, gcn_out)),
        "gcn_err_b":  w(ks[9], (gcn_out,)),
        "ecc_proj_w": w(ks[10], (V_ecc * gcn_out, 2 * hidden_size)),
        "ecc_proj_b": w(ks[11], (2 * hidden_size,)),
        "err_proj_w": w(ks[12], (V_err * gcn_out, 2 * hidden_size)),
        "err_proj_b": w(ks[13], (2 * hidden_size,)),
        "attn_w":     w(ks[14], (2 * hidden_size, 1)),
        "attn_b":     w(ks[15], (1,)),
        "ehr_w":      w(ks[16], (ehr_dim, ehr_out)),
        "ehr_b":      w(ks[17], (ehr_out,)),
        "fc2_w":      w(ks[18], (2 * hidden_size + ehr_out, 1)),
        "fc2_b":      w(ks[19], (1,)),
        # note: fc1 exists in __init__ but is unused on the 'gated' forward path
    }

    ecc = jax.random.normal(ks[20], (B, V_ecc, tf_num), jnp.float32)
    err = jax.random.normal(ks[21], (B, V_err, tf_num), jnp.float32)
    ehr = jax.random.normal(ks[22], (B, ehr_dim), jnp.float32)

    lhat_ecc = build_lhat(*ring_edge_index(V_ecc), V_ecc)
    lhat_err = build_lhat(*ring_edge_index(V_err), V_err)

    # one-time host-side weight folding (hoisted out of the per-call jit)
    kparams, dbg = fold_params(params, lhat_ecc, lhat_err, temporal_out, tf_num)

    fwd = jax.jit(dual_stgcn_forward)
    out = jax.block_until_ready(fwd(kparams, ecc, err, ehr))
    assert out.shape == (B, 1)

    # (1) the constant fold is algebraically exact (float64, host)
    ref64 = reference_np(params, ecc, err, ehr, lhat_ecc, lhat_err)
    fold64 = folded_np(dbg, params, ecc, err, ehr)
    assert np.max(np.abs(ref64 - fold64)) < 1e-9, (ref64, fold64)

    # (2) the kernel matches the folded math at matching (bf16-MXU) numerics
    ref_fold = folded_jnp(kparams, ecc, err, ehr)
    assert jnp.max(jnp.abs(out - ref_fold)) < 1e-3, (out, ref_fold)

    # (3) end-to-end sanity vs the exact float64 reference (bound >> observed
    #     bf16 truncation noise, which is ~1e-3 on this sigmoid output)
    assert np.max(np.abs(np.asarray(out, np.float64) - ref64)) < 2e-2, (out, ref64)

    print("KERNEL_OK")
</pallas_src>

<mosaic_0001>
module attributes {stable_mosaic.version = 11 : i64} {
  func.func @_fused_kernel(%arg0: memref<2x400xf32, #tpu.memory_space<vmem>>, %arg1: memref<2x300xf32, #tpu.memory_space<vmem>>, %arg2: memref<2x10xf32, #tpu.memory_space<vmem>>, %arg3: memref<400x256xbf16, #tpu.memory_space<vmem>>, %arg4: memref<300x256xbf16, #tpu.memory_space<vmem>>, %arg5: memref<10x64xf32, #tpu.memory_space<vmem>>, %arg6: memref<8x256xf32, #tpu.memory_space<vmem>>, %arg7: memref<2x1xf32, #tpu.memory_space<vmem>>) attributes {dimension_semantics = [], scalar_prefetch = 0 : i64, scratch_operands = 0 : i64, tpu.core_type = #tpu.core_type<tc>} {
    %c0 = arith.constant 0 : index
    %c0_0 = arith.constant 0 : index
    %0 = vector.load %arg6[%c0, %c0_0] : memref<8x256xf32, #tpu.memory_space<vmem>>, vector<1x256xf32>
    %c1 = arith.constant 1 : index
    %c0_1 = arith.constant 0 : index
    %1 = vector.load %arg6[%c1, %c0_1] : memref<8x256xf32, #tpu.memory_space<vmem>>, vector<1x256xf32>
    %c2 = arith.constant 2 : index
    %c0_2 = arith.constant 0 : index
    %2 = vector.load %arg6[%c2, %c0_2] : memref<8x256xf32, #tpu.memory_space<vmem>>, vector<1x256xf32>
    %c3 = arith.constant 3 : index
    %c0_3 = arith.constant 0 : index
    %3 = vector.load %arg6[%c3, %c0_3] : memref<8x256xf32, #tpu.memory_space<vmem>>, vector<1x256xf32>
    %c4 = arith.constant 4 : index
    %c0_4 = arith.constant 0 : index
    %4 = vector.load %arg6[%c4, %c0_4] : memref<8x256xf32, #tpu.memory_space<vmem>>, vector<1x64xf32>
    %c5 = arith.constant 5 : index
    %c0_5 = arith.constant 0 : index
    %5 = vector.load %arg6[%c5, %c0_5] : memref<8x256xf32, #tpu.memory_space<vmem>>, vector<1x64xf32>
    %c6 = arith.constant 6 : index
    %c0_6 = arith.constant 0 : index
    %6 = vector.load %arg6[%c6, %c0_6] : memref<8x256xf32, #tpu.memory_space<vmem>>, vector<1x1xf32>
    %c7 = arith.constant 7 : index
    %c0_7 = arith.constant 0 : index
    %7 = vector.load %arg6[%c7, %c0_7] : memref<8x256xf32, #tpu.memory_space<vmem>>, vector<1x1xf32>
    %c0_8 = arith.constant 0 : index
    %c0_9 = arith.constant 0 : index
    %8 = vector.load %arg0[%c0_8, %c0_9] : memref<2x400xf32, #tpu.memory_space<vmem>>, vector<2x400xf32>
    %9 = arith.truncf %8 : vector<2x400xf32> to vector<2x400xbf16>
    %c0_10 = arith.constant 0 : index
    %c0_11 = arith.constant 0 : index
    %10 = vector.load %arg3[%c0_10, %c0_11] : memref<400x256xbf16, #tpu.memory_space<vmem>>, vector<400x256xbf16>
    %cst = arith.constant dense<0.000000e+00> : vector<2x256xf32>
    %11 = tpu.matmul %9, %10, %cst {dimension_numbers = #tpu.dot_dimension_numbers<[1], [0], [0], [1], [0, 0, 1, 1], [], []>} : vector<2x400xbf16>, vector<400x256xbf16>, vector<2x256xf32> -> vector<2x256xf32>
    %12 = vector.broadcast %0 : vector<1x256xf32> to vector<2x256xf32>
    %13 = arith.addf %11, %12 : vector<2x256xf32>
    %c0_12 = arith.constant 0 : index
    %c0_13 = arith.constant 0 : index
    %14 = vector.load %arg1[%c0_12, %c0_13] : memref<2x300xf32, #tpu.memory_space<vmem>>, vector<2x300xf32>
    %15 = arith.truncf %14 : vector<2x300xf32> to vector<2x300xbf16>
    %c0_14 = arith.constant 0 : index
    %c0_15 = arith.constant 0 : index
    %16 = vector.load %arg4[%c0_14, %c0_15] : memref<300x256xbf16, #tpu.memory_space<vmem>>, vector<300x256xbf16>
    %cst_16 = arith.constant dense<0.000000e+00> : vector<2x256xf32>
    %17 = tpu.matmul %15, %16, %cst_16 {dimension_numbers = #tpu.dot_dimension_numbers<[1], [0], [0], [1], [0, 0, 1, 1], [], []>} : vector<2x300xbf16>, vector<300x256xbf16>, vector<2x256xf32> -> vector<2x256xf32>
    %18 = vector.broadcast %1 : vector<1x256xf32> to vector<2x256xf32>
    %19 = arith.addf %17, %18 : vector<2x256xf32>
    %20 = arith.addf %13, %19 : vector<2x256xf32>
    %21 = math.tanh %20 : vector<2x256xf32>
    %22 = vector.broadcast %2 : vector<1x256xf32> to vector<2x256xf32>
    %23 = arith.mulf %21, %22 : vector<2x256xf32>
    %cst_17 = arith.constant dense<0.000000e+00> : vector<2xf32>
    %24 = vector.multi_reduction <add>, %23, %cst_17 [1] : vector<2x256xf32> to vector<2xf32>
    %25 = vector.shape_cast %24 : vector<2xf32> to vector<2x1xf32>
    %26 = vector.broadcast %6 : vector<1x1xf32> to vector<2x1xf32>
    %27 = arith.addf %25, %26 : vector<2x1xf32>
    %cst_18 = arith.constant 5.000000e-01 : f32
    %28 = vector.broadcast %cst_18 : f32 to vector<2x1xf32>
    %29 = arith.mulf %28, %27 : vector<2x1xf32>
    %30 = math.tanh %29 : vector<2x1xf32>
    %cst_19 = arith.constant 1.000000e+00 : f32
    %31 = vector.broadcast %cst_19 : f32 to vector<2x1xf32>
    %32 = arith.addf %30, %31 : vector<2x1xf32>
    %cst_20 = arith.constant 5.000000e-01 : f32
    %33 = vector.broadcast %cst_20 : f32 to vector<2x1xf32>
    %34 = arith.mulf %33, %32 : vector<2x1xf32>
    %35 = vector.broadcast %34 : vector<2x1xf32> to vector<2x256xf32>
    %36 = arith.mulf %35, %13 : vector<2x256xf32>
    %cst_21 = arith.constant 1.000000e+00 : f32
    %37 = vector.broadcast %cst_21 : f32 to vector<2x1xf32>
    %38 = arith.subf %37, %34 : vector<2x1xf32>
    %39 = vector.broadcast %38 : vector<2x1xf32> to vector<2x256xf32>
    %40 = arith.mulf %39, %19 : vector<2x256xf32>
    %41 = arith.addf %36, %40 : vector<2x256xf32>
    %c0_22 = arith.constant 0 : index
    %c0_23 = arith.constant 0 : index
    %42 = vector.load %arg2[%c0_22, %c0_23] : memref<2x10xf32, #tpu.memory_space<vmem>>, vector<2x10xf32>
    %c0_24 = arith.constant 0 : index
    %c0_25 = arith.constant 0 : index
    %43 = vector.load %arg5[%c0_24, %c0_25] : memref<10x64xf32, #tpu.memory_space<vmem>>, vector<10x64xf32>
    %cst_26 = arith.constant dense<0.000000e+00> : vector<2x64xf32>
    %44 = tpu.matmul %42, %43, %cst_26 {dimension_numbers = #tpu.dot_dimension_numbers<[1], [0], [0], [1], [0, 0, 1, 1], [], []>} : vector<2x10xf32>, vector<10x64xf32>, vector<2x64xf32> -> vector<2x64xf32>
    %45 = vector.broadcast %4 : vector<1x64xf32> to vector<2x64xf32>
    %46 = arith.addf %44, %45 : vector<2x64xf32>
    %cst_27 = arith.constant 0.000000e+00 : f32
    %47 = vector.broadcast %cst_27 : f32 to vector<2x64xf32>
    %48 = arith.maximumf %46, %47 : vector<2x64xf32>
    %cst_28 = arith.constant 0.000000e+00 : f32
    %49 = vector.broadcast %cst_28 : f32 to vector<2x256xf32>
    %50 = arith.maximumf %41, %49 : vector<2x256xf32>
    %51 = vector.broadcast %3 : vector<1x256xf32> to vector<2x256xf32>
    %52 = arith.mulf %50, %51 : vector<2x256xf32>
    %cst_29 = arith.constant dense<0.000000e+00> : vector<2xf32>
    %53 = vector.multi_reduction <add>, %52, %cst_29 [1] : vector<2x256xf32> to vector<2xf32>
    %54 = vector.shape_cast %53 : vector<2xf32> to vector<2x1xf32>
    %55 = vector.broadcast %5 : vector<1x64xf32> to vector<2x64xf32>
    %56 = arith.mulf %48, %55 : vector<2x64xf32>
    %cst_30 = arith.constant dense<0.000000e+00> : vector<2xf32>
    %57 = vector.multi_reduction <add>, %56, %cst_30 [1] : vector<2x64xf32> to vector<2xf32>
    %58 = vector.shape_cast %57 : vector<2xf32> to vector<2x1xf32>
    %59 = arith.addf %54, %58 : vector<2x1xf32>
    %60 = vector.broadcast %7 : vector<1x1xf32> to vector<2x1xf32>
    %61 = arith.addf %59, %60 : vector<2x1xf32>
    %cst_31 = arith.constant 5.000000e-01 : f32
    %62 = vector.broadcast %cst_31 : f32 to vector<2x1xf32>
    %63 = arith.mulf %62, %61 : vector<2x1xf32>
    %64 = math.tanh %63 : vector<2x1xf32>
    %cst_32 = arith.constant 1.000000e+00 : f32
    %65 = vector.broadcast %cst_32 : f32 to vector<2x1xf32>
    %66 = arith.addf %64, %65 : vector<2x1xf32>
    %cst_33 = arith.constant 5.000000e-01 : f32
    %67 = vector.broadcast %cst_33 : f32 to vector<2x1xf32>
    %68 = arith.mulf %67, %66 : vector<2x1xf32>
    %c0_34 = arith.constant 0 : index
    %c0_35 = arith.constant 0 : index
    %69 = vector.load %arg7[%c0_34, %c0_35] : memref<2x1xf32, #tpu.memory_space<vmem>>, vector<2x1xf32>
    tpu.vector_store %arg7[%c0_34, %c0_35], %68 {strides = array<i32>} : memref<2x1xf32, #tpu.memory_space<vmem>>, vector<2x1xf32>,
    return
  }
}

</mosaic_0001>

<llo_original>
// kernel: dual_stgcn_forward.1
$region0: #{dual_stgcn_forward.1}
  #allocation0 [shape = 'u32[]', space=smem, size = 0x4, offset = 0x4, fixed_abs, tag = 'smem constant byte address 0x4 - core index']
  #allocation1 [shape = 'u32[144,128]{1,0:T(1,128)}', space=vmem, size = 0x12000, scoped, tag = 'internal scratch']
  %s0 = inlined_call_operand.vmem [shape: f32[2,400], index: 0, kind: input, shape index: {}]
  %s1 = inlined_call_operand.vmem [shape: f32[2,300], index: 1, kind: input, shape index: {}]
  %s2 = inlined_call_operand.vmem [shape: f32[2,10], index: 2, kind: input, shape index: {}]
  %s3 = inlined_call_operand.hbm [shape: bf16[400,256], index: 3, kind: input, shape index: {}]
  %s4 = inlined_call_operand.hbm [shape: bf16[300,256], index: 4, kind: input, shape index: {}]
  %s5 = inlined_call_operand.vmem [shape: f32[10,64], index: 5, kind: input, shape index: {}]
  %s6 = inlined_call_operand.vmem [shape: f32[8,256], index: 6, kind: input, shape index: {}]
  %s7 = inlined_call_operand.vmem [shape: f32[2,1], index: 7, kind: output, shape index: {}]
  %s8 = sld [smem:[#allocation0]]
  $region46: #{dual_stgcn_forward.1} parent=0
    _
  %s10 = ssub.s32 1, %s8
  %s11 = scalar_select 0, %s10, %s8
  $region1: #{dual_stgcn_forward.1} parent=0
    #allocation2 [shape = 'u8[204800]{0}', space=vmem, size = 0x32000, scoped, tag = 'input window, operand 3, single buffered']
    #allocation3 [shape = 's32[1]{0}', space=sflag, size = 0x4, scoped, tag = 'scoped memory for dual_stgcn_forward.1']
    #allocation4 [shape = 'u8[155648]{0}', space=vmem, size = 0x26000, scoped, tag = 'input window, operand 4, single buffered']
    #allocation5 [shape = 's32[1]{0}', space=sflag, size = 0x4, scoped, tag = 'scoped memory for dual_stgcn_forward.1']
    %12 = vsyncpa [#allocation3], 0
    %13 = vsyncpa [#allocation5], 0
    // Predicated region
    $region2: #{dual_stgcn_forward.1} parent=1 // pred_check
      _
    $region3: #{dual_stgcn_forward.1} parent=1 // pred_check_branch
      %15 = sbr.rel (0) target = $region5
    $region4: #{dual_stgcn_forward.1} parent=1 // pred_region
      _
    $region5: #{dual_stgcn_forward.1} parent=1 // pred_fallthru
      _
    // Predicated region
    $region6: #{dual_stgcn_forward.1} parent=1 // pred_check
      _
    $region7: #{dual_stgcn_forward.1} parent=1 // pred_check_branch
      %17 = sbr.rel (0) target = $region9
    $region8: #{dual_stgcn_forward.1} parent=1 // pred_region
      _
    $region9: #{dual_stgcn_forward.1} parent=1 // pred_fallthru
      _
    // Predicated region
    $region10: #{dual_stgcn_forward.1} parent=1 // pred_check
      _
    $region11: #{dual_stgcn_forward.1} parent=1 // pred_check_branch
      %19 = sbr.rel (0) target = $region13
    $region12: #{dual_stgcn_forward.1} parent=1 // pred_region
      _
    $region13: #{dual_stgcn_forward.1} parent=1 // pred_fallthru
      _
    // Predicated region
    $region14: #{dual_stgcn_forward.1} parent=1 // pred_check
      _
    $region15: #{dual_stgcn_forward.1} parent=1 // pred_check_branch
      %21 = sbr.rel (0) target = $region17
    $region16: #{dual_stgcn_forward.1} parent=1 // pred_region
      %s23 = ssub.s32 6400, 6400
      %24 = vsyncadd [#allocation3], %s23
      %s25 = sshll.u32 [#allocation2], 4
      %s26 = int_to_ptr.vmem [resolvable:$true] %s25
      %31 = dma.hbm_to_vmem [thread:$0]  %s3, 6400, %s26, [#allocation3], 128, 128, 8
    $region17: #{dual_stgcn_forward.1} parent=1 // pred_fallthru
      _
    // Predicated region
    $region18: #{dual_stgcn_forward.1} parent=1 // pred_check
      _
    $region19: #{dual_stgcn_forward.1} parent=1 // pred_check_branch
      %33 = sbr.rel (0) target = $region21
    $region20: #{dual_stgcn_forward.1} parent=1 // pred_region
      %s35 = ssub.s32 4864, 4864
      %36 = vsyncadd [#allocation5], %s35
      %s37 = sshll.u32 [#allocation4], 4
      %s38 = int_to_ptr.vmem [resolvable:$true] %s37
      %43 = dma.hbm_to_vmem [thread:$0]  %s4, 4864, %s38, [#allocation5], 128, 128, 8
    $region21: #{dual_stgcn_forward.1} parent=1 // pred_fallthru
      _
    // Predicated region
    $region22: #{dual_stgcn_forward.1} parent=1 // pred_check
      _
    $region23: #{dual_stgcn_forward.1} parent=1 // pred_check_branch
      %45 = sbr.rel (0) target = $region25
    $region24: #{dual_stgcn_forward.1} parent=1 // pred_region
      _
    $region25: #{dual_stgcn_forward.1} parent=1 // pred_fallthru
      _
    // Predicated region
    $region26: #{dual_stgcn_forward.1} parent=1 // pred_check
      _
    $region27: #{dual_stgcn_forward.1} parent=1 // pred_check_branch
      %47 = sbr.rel (0) target = $region29
    $region28: #{dual_stgcn_forward.1} parent=1 // pred_region
      _
    $region29: #{dual_stgcn_forward.1} parent=1 // pred_fallthru
      _
    // Predicated region
    $region30: #{dual_stgcn_forward.1} parent=1 // pred_check
      _
    $region31: #{dual_stgcn_forward.1} parent=1 // pred_check_branch
      %49 = sbr.rel (0) target = $region33
    $region32: #{dual_stgcn_forward.1} parent=1 // pred_region
      %50 = dma.done [#allocation3], 6400
    $region33: #{dual_stgcn_forward.1} parent=1 // pred_fallthru
      _
    // Predicated region
    $region34: #{dual_stgcn_forward.1} parent=1 // pred_check
      _
    $region35: #{dual_stgcn_forward.1} parent=1 // pred_check_branch
      %52 = sbr.rel (0) target = $region37
    $region36: #{dual_stgcn_forward.1} parent=1 // pred_region
      %53 = dma.done [#allocation5], 4864
    $region37: #{dual_stgcn_forward.1} parent=1 // pred_fallthru
      _
    %v55 = vld [vmem:[%s6] ss:$8 sm:$0x3]
    %s56 = scalar_lea.vmem %s6, 1
    %v57 = vld [vmem:[%s56] ss:$8 sm:$0x3]
    %s58 = scalar_lea.vmem %s6, 2
    %v59 = vld [vmem:[%s58] ss:$8 sm:$0x3]
    %s60 = scalar_lea.vmem %s6, 3
    %v61 = vld [vmem:[%s60] ss:$8 sm:$0x3]
    %v62 = vld [vmem:[%s6 + $0x4] ss:$0 sm:$0xff]
    %v63 = vld [vmem:[%s6 + $0x5] ss:$0 sm:$0xff]
    %v64 = vld [vmem:[%s6 + $0x6] ss:$0 sm:$0xff]
    %v65 = vld [vmem:[%s6 + $0x7] ss:$0 sm:$0xff]
    %v66 = vld [vmem:[%s0] sm:$0xff]
    %v68 = vcombine.high %v66, %v66
    %v70 = vunpack.c.l.s4 1983009808
    %v71 = vunpack.c.0.s8 %v70
    %v72 = vlaneseq
    %v73 = vshrl.u32 %v72, 7
    %v74 = vsub.s32 %v71, %v73
    %v75 = vrot.slane %v66, %v74
    %v77 = vunpack.c.l.s4 1983009808
    %v78 = vunpack.c.0.s8 %v77
    %v79 = vlaneseq
    %v80 = vshrl.u32 %v79, 7
    %v81 = vsub.s32 %v78, %v80
    %v82 = vrot.slane %v68, %v81
    %v83 = vcombine.high %v75, %v75
    %v84 = vcombine.high %v82, %v82
    %v89 = vpack.c.bf16 %v75, %v75
    %v90 = vpack.c.bf16 %v83, %v83
    %v91 = vpack.c.bf16 %v82, %v82
    %v92 = vpack.c.bf16 %v84, %v84
    %v93 = vld [vmem:[#allocation2] sm:$0xff]
    %v94 = vld [vmem:[#allocation2 + $0x8] sm:$0xff]
    %v95 = vld [vmem:[#allocation2 + $0x10] sm:$0xff]
    %v96 = vld [vmem:[#allocation2 + $0x18] sm:$0xff]
    %v97 = vld [vmem:[#allocation2 + $0x20] sm:$0xff]
    %v98 = vld [vmem:[#allocation2 + $0x28] sm:$0xff]
    %v99 = vld [vmem:[#allocation2 + $0x30] sm:$0xff]
    %v100 = vld [vmem:[#allocation2 + $0x38] sm:$0xff]
    %v101 = vld [vmem:[#allocation2 + $0x40] sm:$0xff]
    %v102 = vld [vmem:[#allocation2 + $0x48] sm:$0xff]
    %v103 = vld [vmem:[#allocation2 + $0x50] sm:$0xff]
    %v104 = vld [vmem:[#allocation2 + $0x58] sm:$0xff]
    %v105 = vld [vmem:[#allocation2 + $0x60] sm:$0xff]
    %v106 = vld [vmem:[#allocation2 + $0x68] sm:$0xff]
    %v107 = vld [vmem:[#allocation2 + $0x70] sm:$0xff]
    %v108 = vld [vmem:[#allocation2 + $0x78] sm:$0xff]
    %v109 = vld [vmem:[#allocation2 + $0x80] sm:$0xff]
    %v110 = vld [vmem:[#allocation2 + $0x88] sm:$0xff]
    %v111 = vld [vmem:[#allocation2 + $0x90] sm:$0xff]
    %v112 = vld [vmem:[#allocation2 + $0x98] sm:$0xff]
    %v113 = vld [vmem:[#allocation2 + $0xa0] sm:$0xff]
    %v114 = vld [vmem:[#allocation2 + $0xa8] sm:$0xff]
    %v115 = vld [vmem:[#allocation2 + $0xb0] sm:$0xff]
    %v116 = vld [vmem:[#allocation2 + $0xb8] sm:$0xff]
    %v117 = vld [vmem:[#allocation2 + $0xc0] sm:$0xff]
    %v118 = vld [vmem:[#allocation2 + $0xc8] sm:$0xff]
    %v119 = vld [vmem:[#allocation2 + $0xd0] sm:$0xff]
    %v120 = vld [vmem:[#allocation2 + $0xd8] sm:$0xff]
    %v121 = vld [vmem:[#allocation2 + $0xe0] sm:$0xff]
    %v122 = vld [vmem:[#allocation2 + $0xe8] sm:$0xff]
    %v123 = vld [vmem:[#allocation2 + $0xf0] sm:$0xff]
    %v124 = vld [vmem:[#allocation2 + $0xf8] sm:$0xff]
    %v125 = vld [vmem:[#allocation2 + $0x100] sm:$0xff]
    %v126 = vld [vmem:[#allocation2 + $0x108] sm:$0xff]
    %v127 = vld [vmem:[#allocation2 + $0x110] sm:$0xff]
    %v128 = vld [vmem:[#allocation2 + $0x118] sm:$0xff]
    %v129 = vld [vmem:[#allocation2 + $0x120] sm:$0xff]
    %v130 = vld [vmem:[#allocation2 + $0x128] sm:$0xff]
    %v131 = vld [vmem:[#allocation2 + $0x130] sm:$0xff]
    %v132 = vld [vmem:[#allocation2 + $0x138] sm:$0xff]
    %v133 = vld [vmem:[#allocation2 + $0x140] sm:$0xff]
    %v134 = vld [vmem:[#allocation2 + $0x148] sm:$0xff]
    %v135 = vld [vmem:[#allocation2 + $0x150] sm:$0xff]
    %v136 = vld [vmem:[#allocation2 + $0x158] sm:$0xff]
    %v137 = vld [vmem:[#allocation2 + $0x160] sm:$0xff]
    %v138 = vld [vmem:[#allocation2 + $0x168] sm:$0xff]
    %v139 = vld [vmem:[#allocation2 + $0x170] sm:$0xff]
    %v140 = vld [vmem:[#allocation2 + $0x178] sm:$0xff]
    %v141 = vld [vmem:[#allocation2 + $0x180] sm:$0xff]
    %v142 = vld [vmem:[#allocation2 + $0x188] sm:$0xff]
    %v144 = vlaneseq
    %v145 = vshrl.u32 %v144, 7
    %v146 = vsub.s32 0, %v145
    %v147 = vrot.slane %v55, %v146
    %v148 = vlaneseq
    %v149 = vshrl.u32 %v148, 7
    %v150 = vsub.s32 1, %v149
    %v151 = vrot.slane %v55, %v150
    %v204 = vunpack.c.l.b16 %v93
    %v205 = vunpack.c.h.b16 %v93
    %v206 = vunpack.c.l.b16 %v94
    %v207 = vunpack.c.h.b16 %v94
    %v208 = vunpack.c.l.b16 %v95
    %v209 = vunpack.c.h.b16 %v95
    %v210 = vunpack.c.l.b16 %v96
    %v211 = vunpack.c.h.b16 %v96
    %v212 = vunpack.c.l.b16 %v97
    %v213 = vunpack.c.h.b16 %v97
    %v214 = vunpack.c.l.b16 %v98
    %v215 = vunpack.c.h.b16 %v98
    %v216 = vunpack.c.l.b16 %v99
    %v217 = vunpack.c.h.b16 %v99
    %v218 = vunpack.c.l.b16 %v100
    %v219 = vunpack.c.h.b16 %v100
    %v220 = vunpack.c.l.b16 %v101
    %v221 = vunpack.c.h.b16 %v101
    %v222 = vunpack.c.l.b16 %v102
    %v223 = vunpack.c.h.b16 %v102
    %v224 = vunpack.c.l.b16 %v103
    %v225 = vunpack.c.h.b16 %v103
    %v226 = vunpack.c.l.b16 %v104
    %v227 = vunpack.c.h.b16 %v104
    %v228 = vunpack.c.l.b16 %v105
    %v229 = vunpack.c.h.b16 %v105
    %v230 = vunpack.c.l.b16 %v106
    %v231 = vunpack.c.h.b16 %v106
    %v232 = vunpack.c.l.b16 %v107
    %v233 = vunpack.c.h.b16 %v107
    %v234 = vunpack.c.l.b16 %v108
    %v235 = vunpack.c.h.b16 %v108
    %v236 = vunpack.c.l.b16 %v109
    %v237 = vunpack.c.h.b16 %v109
    %v238 = vunpack.c.l.b16 %v110
    %v239 = vunpack.c.h.b16 %v110
    %v240 = vunpack.c.l.b16 %v111
    %v241 = vunpack.c.h.b16 %v111
    %v242 = vunpack.c.l.b16 %v112
    %v243 = vunpack.c.h.b16 %v112
    %v244 = vunpack.c.l.b16 %v113
    %v245 = vunpack.c.h.b16 %v113
    %v246 = vunpack.c.l.b16 %v114
    %v247 = vunpack.c.h.b16 %v114
    %v248 = vunpack.c.l.b16 %v115
    %v249 = vunpack.c.h.b16 %v115
    %v250 = vunpack.c.l.b16 %v116
    %v251 = vunpack.c.h.b16 %v116
    %v252 = vunpack.c.l.b16 %v117
    %v253 = vunpack.c.h.b16 %v117
    %v254 = vunpack.c.l.b16 %v118
    %v255 = vunpack.c.h.b16 %v118
    %v256 = vunpack.c.l.b16 %v119
    %v257 = vunpack.c.h.b16 %v119
    %v258 = vunpack.c.l.b16 %v120
    %v259 = vunpack.c.h.b16 %v120
    %v260 = vunpack.c.l.b16 %v121
    %v261 = vunpack.c.h.b16 %v121
    %v262 = vunpack.c.l.b16 %v122
    %v263 = vunpack.c.h.b16 %v122
    %v264 = vunpack.c.l.b16 %v123
    %v265 = vunpack.c.h.b16 %v123
    %v266 = vunpack.c.l.b16 %v124
    %v267 = vunpack.c.h.b16 %v124
    %v268 = vunpack.c.l.b16 %v125
    %v269 = vunpack.c.h.b16 %v125
    %v270 = vunpack.c.l.b16 %v126
    %v271 = vunpack.c.h.b16 %v126
    %v272 = vunpack.c.l.b16 %v127
    %v273 = vunpack.c.h.b16 %v127
    %v274 = vunpack.c.l.b16 %v128
    %v275 = vunpack.c.h.b16 %v128
    %v276 = vunpack.c.l.b16 %v129
    %v277 = vunpack.c.h.b16 %v129
    %v278 = vunpack.c.l.b16 %v130
    %v279 = vunpack.c.h.b16 %v130
    %v280 = vunpack.c.l.b16 %v131
    %v281 = vunpack.c.h.b16 %v131
    %v282 = vunpack.c.l.b16 %v132
    %v283 = vunpack.c.h.b16 %v132
    %v284 = vunpack.c.l.b16 %v133
    %v285 = vunpack.c.h.b16 %v133
    %v286 = vunpack.c.l.b16 %v134
    %v287 = vunpack.c.h.b16 %v134
    %v288 = vunpack.c.l.b16 %v135
    %v289 = vunpack.c.h.b16 %v135
    %v290 = vunpack.c.l.b16 %v136
    %v291 = vunpack.c.h.b16 %v136
    %v292 = vunpack.c.l.b16 %v137
    %v293 = vunpack.c.h.b16 %v137
    %v294 = vunpack.c.l.b16 %v138
    %v295 = vunpack.c.h.b16 %v138
    %v296 = vunpack.c.l.b16 %v139
    %v297 = vunpack.c.h.b16 %v139
    %v298 = vunpack.c.l.b16 %v140
    %v299 = vunpack.c.h.b16 %v140
    %v300 = vunpack.c.l.b16 %v141
    %v301 = vunpack.c.h.b16 %v141
    %v302 = vunpack.c.l.b16 %v142
    %v303 = vunpack.c.h.b16 %v142
    %v304 = vpack.c.b16 %v206, %v204
    %v305 = vpack.c.b16 %v207, %v205
    %v306 = vpack.c.b16 %v210, %v208
    %v307 = vpack.c.b16 %v211, %v209
    %v308 = vpack.c.b16 %v214, %v212
    %v309 = vpack.c.b16 %v215, %v213
    %v310 = vpack.c.b16 %v218, %v216
    %v311 = vpack.c.b16 %v219, %v217
    %v312 = vpack.c.b16 %v222, %v220
    %v313 = vpack.c.b16 %v223, %v221
    %v314 = vpack.c.b16 %v226, %v224
    %v315 = vpack.c.b16 %v227, %v225
    %v316 = vpack.c.b16 %v230, %v228
    %v317 = vpack.c.b16 %v231, %v229
    %v318 = vpack.c.b16 %v234, %v232
    %v319 = vpack.c.b16 %v235, %v233
    %v320 = vpack.c.b16 %v238, %v236
    %v321 = vpack.c.b16 %v239, %v237
    %v322 = vpack.c.b16 %v242, %v240
    %v323 = vpack.c.b16 %v243, %v241
    %v324 = vpack.c.b16 %v246, %v244
    %v325 = vpack.c.b16 %v247, %v245
    %v326 = vpack.c.b16 %v250, %v248
    %v327 = vpack.c.b16 %v251, %v249
    %v328 = vpack.c.b16 %v254, %v252
    %v329 = vpack.c.b16 %v255, %v253
    %v330 = vpack.c.b16 %v258, %v256
    %v331 = vpack.c.b16 %v259, %v257
    %v332 = vpack.c.b16 %v262, %v260
    %v333 = vpack.c.b16 %v263, %v261
    %v334 = vpack.c.b16 %v266, %v264
    %v335 = vpack.c.b16 %v267, %v265
    %v336 = vpack.c.b16 %v270, %v268
    %v337 = vpack.c.b16 %v271, %v269
    %v338 = vpack.c.b16 %v274, %v272
    %v339 = vpack.c.b16 %v275, %v273
    %v340 = vpack.c.b16 %v278, %v276
    %v341 = vpack.c.b16 %v279, %v277
    %v342 = vpack.c.b16 %v282, %v280
    %v343 = vpack.c.b16 %v283, %v281
    %v344 = vpack.c.b16 %v286, %v284
    %v345 = vpack.c.b16 %v287, %v285
    %v346 = vpack.c.b16 %v290, %v288
    %v347 = vpack.c.b16 %v291, %v289
    %v348 = vpack.c.b16 %v294, %v292
    %v349 = vpack.c.b16 %v295, %v293
    %v350 = vpack.c.b16 %v298, %v296
    %v351 = vpack.c.b16 %v299, %v297
    %v352 = vpack.c.b16 %v302, %v300
    %v353 = vpack.c.b16 %v303, %v301
    %vm404 = vcmask 130048
    %v406 = vsel %vm404, %v92, 0
    %408 = vmatprep.subr.bf16.mxu0 %v319
    %409 = vmatpush1.bf16.msra.mxu0 %v318
    %410 = vmatprep.subr.bf16.mxu0 %v317
    %411 = vmatpush1.bf16.msra.mxu0 %v316
    %412 = vmatprep.subr.bf16.mxu0 %v315
    %413 = vmatpush1.bf16.msra.mxu0 %v314
    %414 = vmatprep.subr.bf16.mxu0 %v313
    %415 = vmatpush1.bf16.msra.mxu0 %v312
    %416 = vmatprep.subr.bf16.mxu0 %v311
    %417 = vmatpush1.bf16.msra.mxu0 %v310
    %418 = vmatprep.subr.bf16.mxu0 %v309
    %419 = vmatpush1.bf16.msra.mxu0 %v308
    %420 = vmatprep.subr.bf16.mxu0 %v307
    %421 = vmatpush1.bf16.msra.mxu0 %v306
    %422 = vmatprep.subr.bf16.mxu0 %v305
    %423 = vmatpush1.bf16.msra.mxu0 %v304
    %424 = vmatprep.subr.bf16.mxu0 %v335
    %425 = vmatpush2.bf16.msra.mxu0 %v334
    %426 = vmatprep.subr.bf16.mxu0 %v333
    %427 = vmatpush2.bf16.msra.mxu0 %v332
    %428 = vmatprep.subr.bf16.mxu0 %v331
    %429 = vmatpush2.bf16.msra.mxu0 %v330
    %430 = vmatprep.subr.bf16.mxu0 %v329
    %431 = vmatpush2.bf16.msra.mxu0 %v328
    %432 = vmatprep.subr.bf16.mxu0 %v327
    %433 = vmatpush2.bf16.msra.mxu0 %v326
    %434 = vmatprep.subr.bf16.mxu0 %v325
    %435 = vmatpush2.bf16.msra.mxu0 %v324
    %436 = vmatprep.subr.bf16.mxu0 %v323
    %437 = vmatpush2.bf16.msra.mxu0 %v322
    %438 = vmatprep.subr.bf16.mxu0 %v321
    %439 = vmatpush2.bf16.msra.mxu0 %v320
    %440 = vmatprep.mubr.bf16.mxu0 %v90
    %441 = vmatmul.mubr.bf16.gmra.mxu0 %v89
    %v442 = vpop.f32.mrf.mxu0
    %v443 = vadd.f32 %v147, %v442
    %v444 = vpop.f32.mrf.mxu0
    %v445 = vadd.f32 %v151, %v444
    %v446 = vpop.f32.mrf.mxu0
    %v447 = vpop.f32.mrf.mxu0
    %448 = vdwg.mxu0
    %449 = vmatprep.subr.bf16.mxu0 %v351
    %450 = vmatpush1.bf16.msra.mxu0 %v350
    %451 = vmatprep.subr.bf16.mxu0 %v349
    %452 = vmatpush1.bf16.msra.mxu0 %v348
    %453 = vmatprep.subr.bf16.mxu0 %v347
    %454 = vmatpush1.bf16.msra.mxu0 %v346
    %455 = vmatprep.subr.bf16.mxu0 %v345
    %456 = vmatpush1.bf16.msra.mxu0 %v344
    %457 = vmatprep.subr.bf16.mxu0 %v343
    %458 = vmatpush1.bf16.msra.mxu0 %v342
    %459 = vmatprep.subr.bf16.mxu0 %v341
    %460 = vmatpush1.bf16.msra.mxu0 %v340
    %461 = vmatprep.subr.bf16.mxu0 %v339
    %462 = vmatpush1.bf16.msra.mxu0 %v338
    %463 = vmatprep.subr.bf16.mxu0 %v337
    %464 = vmatpush1.bf16.msra.mxu0 %v336
    %465 = vmatprep.subr.bf16.mxu0 0
    %466 = vmatpush2.bf16.msra.mxu0 0
    %467 = vmatprep.subr.bf16.mxu0 0
    %468 = vmatpush2.bf16.msra.mxu0 0
    %469 = vmatprep.subr.bf16.mxu0 0
    %470 = vmatpush2.bf16.msra.mxu0 0
    %471 = vmatprep.subr.bf16.mxu0 0
    %472 = vmatpush2.bf16.msra.mxu0 0
    %473 = vmatprep.subr.bf16.mxu0 0
    %474 = vmatpush2.bf16.msra.mxu0 0
    %475 = vmatprep.subr.bf16.mxu0 0
    %476 = vmatpush2.bf16.msra.mxu0 0
    %477 = vmatprep.subr.bf16.mxu0 0
    %478 = vmatpush2.bf16.msra.mxu0 0
    %479 = vmatprep.subr.bf16.mxu0 %v353
    %480 = vmatpush2.bf16.msra.mxu0 %v352
    %481 = vmatprep.mubr.bf16.mxu0 %v406
    %482 = vmatmul.mubr.bf16.gmra.mxu0 %v91
    %v483 = vpop.f32.mrf.mxu0
    %v484 = vadd.f32 %v443, %v483
    %v485 = vpop.f32.mrf.mxu0
    %v486 = vadd.f32 %v445, %v485
    %v487 = vpop.f32.mrf.mxu0
    %v488 = vpop.f32.mrf.mxu0
    %489 = vdwg.mxu0
    %v490 = vld [vmem:[%s1] sm:$0x3f]
    %v492 = vcombine.high %v490, %v490
    %v494 = vunpack.c.l.s4 1983009808
    %v495 = vunpack.c.0.s8 %v494
    %v496 = vlaneseq
    %v497 = vshrl.u32 %v496, 7
    %v498 = vsub.s32 %v495, %v497
    %v499 = vrot.slane %v490, %v498
    %v501 = vunpack.c.l.s4 1983009808
    %v502 = vunpack.c.0.s8 %v501
    %v503 = vlaneseq
    %v504 = vshrl.u32 %v503, 7
    %v505 = vsub.s32 %v502, %v504
    %v506 = vrot.slane %v492, %v505
    %v507 = vcombine.high %v499, %v499
    %v511 = vpack.c.bf16 %v499, %v499
    %v512 = vpack.c.bf16 %v507, %v507
    %v513 = vpack.c.bf16 %v506, %v506
    %v514 = vld [vmem:[#allocation4] sm:$0xff]
    %v515 = vld [vmem:[#allocation4 + $0x8] sm:$0xff]
    %v516 = vld [vmem:[#allocation4 + $0x10] sm:$0xff]
    %v517 = vld [vmem:[#allocation4 + $0x18] sm:$0xff]
    %v518 = vld [vmem:[#allocation4 + $0x20] sm:$0xff]
    %v519 = vld [vmem:[#allocation4 + $0x28] sm:$0xff]
    %v520 = vld [vmem:[#allocation4 + $0x30] sm:$0xff]
    %v521 = vld [vmem:[#allocation4 + $0x38] sm:$0xff]
    %v522 = vld [vmem:[#allocation4 + $0x40] sm:$0xff]
    %v523 = vld [vmem:[#allocation4 + $0x48] sm:$0xff]
    %v524 = vld [vmem:[#allocation4 + $0x50] sm:$0xff]
    %v525 = vld [vmem:[#allocation4 + $0x58] sm:$0xff]
    %v526 = vld [vmem:[#allocation4 + $0x60] sm:$0xff]
    %v527 = vld [vmem:[#allocation4 + $0x68] sm:$0xff]
    %v528 = vld [vmem:[#allocation4 + $0x70] sm:$0xff]
    %v529 = vld [vmem:[#allocation4 + $0x78] sm:$0xff]
    %v530 = vld [vmem:[#allocation4 + $0x80] sm:$0xff]
    %v531 = vld [vmem:[#allocation4 + $0x88] sm:$0xff]
    %v532 = vld [vmem:[#allocation4 + $0x90] sm:$0xff]
    %v533 = vld [vmem:[#allocation4 + $0x98] sm:$0xff]
    %v534 = vld [vmem:[#allocation4 + $0xa0] sm:$0xff]
    %v535 = vld [vmem:[#allocation4 + $0xa8] sm:$0xff]
    %v536 = vld [vmem:[#allocation4 + $0xb0] sm:$0xff]
    %v537 = vld [vmem:[#allocation4 + $0xb8] sm:$0xff]
    %v538 = vld [vmem:[#allocation4 + $0xc0] sm:$0xff]
    %v539 = vld [vmem:[#allocation4 + $0xc8] sm:$0xff]
    %v540 = vld [vmem:[#allocation4 + $0xd0] sm:$0xff]
    %v541 = vld [vmem:[#allocation4 + $0xd8] sm:$0xff]
    %v542 = vld [vmem:[#allocation4 + $0xe0] sm:$0xff]
    %v543 = vld [vmem:[#allocation4 + $0xe8] sm:$0xff]
    %v544 = vld [vmem:[#allocation4 + $0xf0] sm:$0xff]
    %v545 = vld [vmem:[#allocation4 + $0xf8] sm:$0xff]
    %v546 = vld [vmem:[#allocation4 + $0x100] sm:$0xff]
    %v547 = vld [vmem:[#allocation4 + $0x108] sm:$0xff]
    %v548 = vld [vmem:[#allocation4 + $0x110] sm:$0xff]
    %v549 = vld [vmem:[#allocation4 + $0x118] sm:$0xff]
    %v550 = vld [vmem:[#allocation4 + $0x120] sm:$0xff]
    %v551 = vld [vmem:[#allocation4 + $0x128] sm:$0x33]
    %v553 = vlaneseq
    %v554 = vshrl.u32 %v553, 7
    %v555 = vsub.s32 0, %v554
    %v556 = vrot.slane %v57, %v555
    %v557 = vlaneseq
    %v558 = vshrl.u32 %v557, 7
    %v559 = vsub.s32 1, %v558
    %v560 = vrot.slane %v57, %v559
    %v601 = vunpack.c.l.b16 %v514
    %v602 = vunpack.c.h.b16 %v514
    %v603 = vunpack.c.l.b16 %v515
    %v604 = vunpack.c.h.b16 %v515
    %v605 = vunpack.c.l.b16 %v516
    %v606 = vunpack.c.h.b16 %v516
    %v607 = vunpack.c.l.b16 %v517
    %v608 = vunpack.c.h.b16 %v517
    %v609 = vunpack.c.l.b16 %v518
    %v610 = vunpack.c.h.b16 %v518
    %v611 = vunpack.c.l.b16 %v519
    %v612 = vunpack.c.h.b16 %v519
    %v613 = vunpack.c.l.b16 %v520
    %v614 = vunpack.c.h.b16 %v520
    %v615 = vunpack.c.l.b16 %v521
    %v616 = vunpack.c.h.b16 %v521
    %v617 = vunpack.c.l.b16 %v522
    %v618 = vunpack.c.h.b16 %v522
    %v619 = vunpack.c.l.b16 %v523
    %v620 = vunpack.c.h.b16 %v523
    %v621 = vunpack.c.l.b16 %v524
    %v622 = vunpack.c.h.b16 %v524
    %v623 = vunpack.c.l.b16 %v525
    %v624 = vunpack.c.h.b16 %v525
    %v625 = vunpack.c.l.b16 %v526
    %v626 = vunpack.c.h.b16 %v526
    %v627 = vunpack.c.l.b16 %v527
    %v628 = vunpack.c.h.b16 %v527
    %v629 = vunpack.c.l.b16 %v528
    %v630 = vunpack.c.h.b16 %v528
    %v631 = vunpack.c.l.b16 %v529
    %v632 = vunpack.c.h.b16 %v529
    %v633 = vunpack.c.l.b16 %v530
    %v634 = vunpack.c.h.b16 %v530
    %v635 = vunpack.c.l.b16 %v531
    %v636 = vunpack.c.h.b16 %v531
    %v637 = vunpack.c.l.b16 %v532
    %v638 = vunpack.c.h.b16 %v532
    %v639 = vunpack.c.l.b16 %v533
    %v640 = vunpack.c.h.b16 %v533
    %v641 = vunpack.c.l.b16 %v534
    %v642 = vunpack.c.h.b16 %v534
    %v643 = vunpack.c.l.b16 %v535
    %v644 = vunpack.c.h.b16 %v535
    %v645 = vunpack.c.l.b16 %v536
    %v646 = vunpack.c.h.b16 %v536
    %v647 = vunpack.c.l.b16 %v537
    %v648 = vunpack.c.h.b16 %v537
    %v649 = vunpack.c.l.b16 %v538
    %v650 = vunpack.c.h.b16 %v538
    %v651 = vunpack.c.l.b16 %v539
    %v652 = vunpack.c.h.b16 %v539
    %v653 = vunpack.c.l.b16 %v540
    %v654 = vunpack.c.h.b16 %v540
    %v655 = vunpack.c.l.b16 %v541
    %v656 = vunpack.c.h.b16 %v541
    %v657 = vunpack.c.l.b16 %v542
    %v658 = vunpack.c.h.b16 %v542
    %v659 = vunpack.c.l.b16 %v543
    %v660 = vunpack.c.h.b16 %v543
    %v661 = vunpack.c.l.b16 %v544
    %v662 = vunpack.c.h.b16 %v544
    %v663 = vunpack.c.l.b16 %v545
    %v664 = vunpack.c.h.b16 %v545
    %v665 = vunpack.c.l.b16 %v546
    %v666 = vunpack.c.h.b16 %v546
    %v667 = vunpack.c.l.b16 %v547
    %v668 = vunpack.c.h.b16 %v547
    %v669 = vunpack.c.l.b16 %v548
    %v670 = vunpack.c.h.b16 %v548
    %v671 = vunpack.c.l.b16 %v549
    %v672 = vunpack.c.h.b16 %v549
    %v673 = vunpack.c.l.b16 %v550
    %v674 = vunpack.c.h.b16 %v550
    %v675 = vunpack.c.l.b16 %v551
    %v676 = vunpack.c.h.b16 %v551
    %v677 = vpack.c.b16 %v603, %v601
    %v678 = vpack.c.b16 %v604, %v602
    %v679 = vpack.c.b16 %v607, %v605
    %v680 = vpack.c.b16 %v608, %v606
    %v681 = vpack.c.b16 %v611, %v609
    %v682 = vpack.c.b16 %v612, %v610
    %v683 = vpack.c.b16 %v615, %v613
    %v684 = vpack.c.b16 %v616, %v614
    %v685 = vpack.c.b16 %v619, %v617
    %v686 = vpack.c.b16 %v620, %v618
    %v687 = vpack.c.b16 %v623, %v621
    %v688 = vpack.c.b16 %v624, %v622
    %v689 = vpack.c.b16 %v627, %v625
    %v690 = vpack.c.b16 %v628, %v626
    %v691 = vpack.c.b16 %v631, %v629
    %v692 = vpack.c.b16 %v632, %v630
    %v693 = vpack.c.b16 %v635, %v633
    %v694 = vpack.c.b16 %v636, %v634
    %v695 = vpack.c.b16 %v639, %v637
    %v696 = vpack.c.b16 %v640, %v638
    %v697 = vpack.c.b16 %v643, %v641
    %v698 = vpack.c.b16 %v644, %v642
    %v699 = vpack.c.b16 %v647, %v645
    %v700 = vpack.c.b16 %v648, %v646
    %v701 = vpack.c.b16 %v651, %v649
    %v702 = vpack.c.b16 %v652, %v650
    %v703 = vpack.c.b16 %v655, %v653
    %v704 = vpack.c.b16 %v656, %v654
    %v705 = vpack.c.b16 %v659, %v657
    %v706 = vpack.c.b16 %v660, %v658
    %v707 = vpack.c.b16 %v663, %v661
    %v708 = vpack.c.b16 %v664, %v662
    %v709 = vpack.c.b16 %v667, %v665
    %v710 = vpack.c.b16 %v668, %v666
    %v711 = vpack.c.b16 %v671, %v669
    %v712 = vpack.c.b16 %v672, %v670
    %v713 = vpack.c.b16 %v675, %v673
    %v714 = vpack.c.b16 %v676, %v674
    %vm751 = vcmask 359424
    %v753 = vsel %vm751, %v513, 0
    %vm755 = vcmask 1045504
    %v757 = vsel %vm755, %v713, 0
    %v760 = vsel %vm755, %v714, 0
    %762 = vmatprep.subr.bf16.mxu0 %v692
    %763 = vmatpush1.bf16.msra.mxu0 %v691
    %764 = vmatprep.subr.bf16.mxu0 %v690
    %765 = vmatpush1.bf16.msra.mxu0 %v689
    %766 = vmatprep.subr.bf16.mxu0 %v688
    %767 = vmatpush1.bf16.msra.mxu0 %v687
    %768 = vmatprep.subr.bf16.mxu0 %v686
    %769 = vmatpush1.bf16.msra.mxu0 %v685
    %770 = vmatprep.subr.bf16.mxu0 %v684
    %771 = vmatpush1.bf16.msra.mxu0 %v683
    %772 = vmatprep.subr.bf16.mxu0 %v682
    %773 = vmatpush1.bf16.msra.mxu0 %v681
    %774 = vmatprep.subr.bf16.mxu0 %v680
    %775 = vmatpush1.bf16.msra.mxu0 %v679
    %776 = vmatprep.subr.bf16.mxu0 %v678
    %777 = vmatpush1.bf16.msra.mxu0 %v677
    %778 = vmatprep.subr.bf16.mxu0 %v708
    %779 = vmatpush2.bf16.msra.mxu0 %v707
    %780 = vmatprep.subr.bf16.mxu0 %v706
    %781 = vmatpush2.bf16.msra.mxu0 %v705
    %782 = vmatprep.subr.bf16.mxu0 %v704
    %783 = vmatpush2.bf16.msra.mxu0 %v703
    %784 = vmatprep.subr.bf16.mxu0 %v702
    %785 = vmatpush2.bf16.msra.mxu0 %v701
    %786 = vmatprep.subr.bf16.mxu0 %v700
    %787 = vmatpush2.bf16.msra.mxu0 %v699
    %788 = vmatprep.subr.bf16.mxu0 %v698
    %789 = vmatpush2.bf16.msra.mxu0 %v697
    %790 = vmatprep.subr.bf16.mxu0 %v696
    %791 = vmatpush2.bf16.msra.mxu0 %v695
    %792 = vmatprep.subr.bf16.mxu0 %v694
    %793 = vmatpush2.bf16.msra.mxu0 %v693
    %794 = vmatprep.mubr.bf16.mxu0 %v512
    %795 = vmatmul.mubr.bf16.gmra.mxu0 %v511
    %v796 = vpop.f32.mrf.mxu0
    %v797 = vadd.f32 %v556, %v796
    %v798 = vpop.f32.mrf.mxu0
    %v799 = vadd.f32 %v560, %v798
    %v800 = vpop.f32.mrf.mxu0
    %v801 = vpop.f32.mrf.mxu0
    %802 = vdwg.mxu0
    %803 = vmatprep.subr.bf16.mxu0 0
    %804 = vmatpush1.bf16.msra.mxu0 0
    %805 = vmatprep.subr.bf16.mxu0 0
    %806 = vmatpush1.bf16.msra.mxu0 0
    %807 = vmatprep.subr.bf16.mxu0 0
    %808 = vmatpush1.bf16.msra.mxu0 0
    %809 = vmatprep.subr.bf16.mxu0 0
    %810 = vmatpush1.bf16.msra.mxu0 0
    %811 = vmatprep.subr.bf16.mxu0 0
    %812 = vmatpush1.bf16.msra.mxu0 0
    %813 = vmatprep.subr.bf16.mxu0 %v760
    %814 = vmatpush1.bf16.msra.mxu0 %v757
    %815 = vmatprep.subr.bf16.mxu0 %v712
    %816 = vmatpush1.bf16.msra.mxu0 %v711
    %817 = vmatprep.subr.bf16.mxu0 %v710
    %818 = vmatpush1.bf16.msra.mxu0 %v709
    %819 = vmatprep.subr.bf16.mxu0 0
    %820 = vmatpush2.bf16.msra.mxu0 0
    %821 = vmatprep.subr.bf16.mxu0 0
    %822 = vmatpush2.bf16.msra.mxu0 0
    %823 = vmatprep.subr.bf16.mxu0 0
    %824 = vmatpush2.bf16.msra.mxu0 0
    %825 = vmatprep.subr.bf16.mxu0 0
    %826 = vmatpush2.bf16.msra.mxu0 0
    %827 = vmatprep.subr.bf16.mxu0 0
    %828 = vmatpush2.bf16.msra.mxu0 0
    %829 = vmatprep.subr.bf16.mxu0 0
    %830 = vmatpush2.bf16.msra.mxu0 0
    %831 = vmatprep.subr.bf16.mxu0 0
    %832 = vmatpush2.bf16.msra.mxu0 0
    %833 = vmatprep.subr.bf16.mxu0 0
    %834 = vmatpush2.bf16.msra.mxu0 0
    %835 = vmatprep.mubr.bf16.mxu0 0
    %836 = vmatmul.mubr.bf16.gmra.mxu0 %v753
    %v837 = vpop.f32.mrf.mxu0
    %v838 = vadd.f32 %v797, %v837
    %v839 = vpop.f32.mrf.mxu0
    %v840 = vadd.f32 %v799, %v839
    %v841 = vpop.f32.mrf.mxu0
    %v842 = vpop.f32.mrf.mxu0
    %843 = vdwg.mxu0
    %v844 = vadd.f32 %v484, %v838
    %v845 = vadd.f32 %v486, %v840
    %v846 = vtanh.pop %v844
    %v847 = vtanh.pop %v845
    %v849 = vlaneseq
    %v850 = vshrl.u32 %v849, 7
    %v851 = vsub.s32 0, %v850
    %v852 = vrot.slane %v59, %v851
    %v853 = vlaneseq
    %v854 = vshrl.u32 %v853, 7
    %v855 = vsub.s32 1, %v854
    %v856 = vrot.slane %v59, %v855
    %v859 = vmul.f32 %v846, %v852
    %v860 = vmul.f32 %v847, %v856
    %vm861 = vcmask 1041408
    %v862 = vsel %vm861, %v859, 0.0
    %v863 = vsel %vm861, %v860, 0.0
    %v864 = vadd.f32 %v862, %v863
    %865 = vadd.xlane.f32.xlu0 %v864
    %v866 = vpop.xlane.xlu0 %865
    %v867 = vadd.f32 %v866, %v64
    %v868 = vmul.f32 %v867, 0.5
    %v869 = vtanh.pop %v868
    %v870 = vadd.f32 %v869, 1.0
    %v871 = vmul.f32 %v870, 0.5
    %873 = vset.pattern.permute.xlu0 0
    %874 = vperm.xlu0 %873, %v871
    %v875 = vpop.permute.xlu0 %874
    %v877 = vmul.f32 %v875, %v484
    %v878 = vmul.f32 %v875, %v486
    %v879 = vsub.f32 1.0, %v871
    %881 = vset.pattern.permute.xlu0 0
    %882 = vperm.xlu0 %881, %v879
    %v883 = vpop.permute.xlu0 %882
    %v885 = vmul.f32 %v883, %v838
    %v886 = vmul.f32 %v883, %v840
    %v887 = vadd.f32 %v877, %v885
    %v888 = vadd.f32 %v878, %v886
    %v889 = vld [vmem:[%s2] sm:$0x3]
    %v890 = vld [vmem:[%s5] sm:$0xff]
    %v891 = vld [vmem:[%s5 + $0x8] sm:$0x3]
    %vm892 = vcmask 80896
    %v894 = vsel %vm892, %v889, 0
    %v897 = vsel %vm861, %v891, 0
    %899 = vmatprep.subr.mxu0 0.0
    %900 = vmatpush1.msra.mxu0 0.0
    %901 = vmatprep.subr.mxu0 0.0
    %902 = vmatpush1.msra.mxu0 0.0
    %903 = vmatprep.subr.mxu0 0.0
    %904 = vmatpush1.msra.mxu0 0.0
    %905 = vmatprep.subr.mxu0 0.0
    %906 = vmatpush1.msra.mxu0 0.0
    %907 = vmatprep.subr.mxu0 0.0
    %908 = vmatpush1.msra.mxu0 0.0
    %909 = vmatprep.subr.mxu0 0.0
    %910 = vmatpush1.msra.mxu0 0.0
    %911 = vmatprep.subr.mxu0 0.0
    %912 = vmatpush1.msra.mxu0 0.0
    %913 = vmatprep.subr.mxu0 0.0
    %914 = vmatpush1.msra.mxu0 0.0
    %915 = vmatprep.subr.mxu0 0.0
    %916 = vmatpush1.msra.mxu0 0.0
    %917 = vmatprep.subr.mxu0 0.0
    %918 = vmatpush1.msra.mxu0 0.0
    %919 = vmatprep.subr.mxu0 0.0
    %920 = vmatpush1.msra.mxu0 0.0
    %921 = vmatprep.subr.mxu0 0.0
    %922 = vmatpush1.msra.mxu0 0.0
    %923 = vmatprep.subr.mxu0 0.0
    %924 = vmatpush1.msra.mxu0 0.0
    %925 = vmatprep.subr.mxu0 0.0
    %926 = vmatpush1.msra.mxu0 0.0
    %927 = vmatprep.subr.mxu0 0.0
    %928 = vmatpush1.msra.mxu0 %v897
    %929 = vmatprep.subr.mxu0 0.0
    %930 = vmatpush1.msra.mxu0 %v890
    %931 = vmatprep.subr.mxu0 0.0
    %932 = vmatpush2.msra.mxu0 0.0
    %933 = vmatprep.subr.mxu0 0.0
    %934 = vmatpush2.msra.mxu0 0.0
    %935 = vmatprep.subr.mxu0 0.0
    %936 = vmatpush2.msra.mxu0 0.0
    %937 = vmatprep.subr.mxu0 0.0
    %938 = vmatpush2.msra.mxu0 0.0
    %939 = vmatprep.subr.mxu0 0.0
    %940 = vmatpush2.msra.mxu0 0.0
    %941 = vmatprep.subr.mxu0 0.0
    %942 = vmatpush2.msra.mxu0 0.0
    %943 = vmatprep.subr.mxu0 0.0
    %944 = vmatpush2.msra.mxu0 0.0
    %945 = vmatprep.subr.mxu0 0.0
    %946 = vmatpush2.msra.mxu0 0.0
    %947 = vmatprep.subr.mxu0 0.0
    %948 = vmatpush2.msra.mxu0 0.0
    %949 = vmatprep.subr.mxu0 0.0
    %950 = vmatpush2.msra.mxu0 0.0
    %951 = vmatprep.subr.mxu0 0.0
    %952 = vmatpush2.msra.mxu0 0.0
    %953 = vmatprep.subr.mxu0 0.0
    %954 = vmatpush2.msra.mxu0 0.0
    %955 = vmatprep.subr.mxu0 0.0
    %956 = vmatpush2.msra.mxu0 0.0
    %957 = vmatprep.subr.mxu0 0.0
    %958 = vmatpush2.msra.mxu0 0.0
    %959 = vmatprep.subr.mxu0 0.0
    %960 = vmatpush2.msra.mxu0 0.0
    %961 = vmatprep.subr.mxu0 0.0
    %962 = vmatpush2.msra.mxu0 0.0
    %963 = vmatprep.mubr.f32.mxu0 0.0
    %964 = vmatmul.mubr.f32.gmra.mxu0 %v894
    %v965 = vpop.f32.mrf.mxu0
    %v966 = vadd.f32 %v62, %v965
    %v967 = vpop.f32.mrf.mxu0
    %968 = vdwg.mxu0
    %v969 = vmax.f32 %v966, 0.0
    %v970 = vmax.f32 %v887, 0.0
    %v971 = vmax.f32 %v888, 0.0
    %v973 = vlaneseq
    %v974 = vshrl.u32 %v973, 7
    %v975 = vsub.s32 0, %v974
    %v976 = vrot.slane %v61, %v975
    %v977 = vlaneseq
    %v978 = vshrl.u32 %v977, 7
    %v979 = vsub.s32 1, %v978
    %v980 = vrot.slane %v61, %v979
    %v983 = vmul.f32 %v970, %v976
    %v984 = vmul.f32 %v971, %v980
    %v985 = vsel %vm861, %v983, 0.0
    %v986 = vsel %vm861, %v984, 0.0
    %v987 = vadd.f32 %v985, %v986
    %988 = vadd.xlane.f32.xlu0 %v987
    %v989 = vpop.xlane.xlu0 %988
    %v990 = vmul.f32 %v969, %v63
    %vm991 = vcmask 517120
    %v992 = vsel %vm991, %v990, 0.0
    %993 = vadd.xlane.f32.xlu0 %v992
    %v994 = vpop.xlane.xlu0 %993
    %v995 = vadd.f32 %v989, %v994
    %v996 = vadd.f32 %v995, %v65
    %v997 = vmul.f32 %v996, 0.5
    %v998 = vtanh.pop %v997
    %v999 = vadd.f32 %v998, 1.0
    %v1000 = vmul.f32 %v999, 0.5
    %vm1001 = vcmask 1024
    %1002 = vst.msk [vmem:[%s7] sm:$0x3] %vm1001, %v1000
    // Predicated region
    $region38: #{dual_stgcn_forward.1} parent=1 // pred_check
      _
    $region39: #{dual_stgcn_forward.1} parent=1 // pred_check_branch
      %1004 = sbr.rel (0) target = $region41
    $region40: #{dual_stgcn_forward.1} parent=1 // pred_region
      _
    $region41: #{dual_stgcn_forward.1} parent=1 // pred_fallthru
      _
    // Predicated region
    $region42: #{dual_stgcn_forward.1} parent=1 // pred_check
      _
    $region43: #{dual_stgcn_forward.1} parent=1 // pred_check_branch
      %1006 = sbr.rel (0) target = $region45
    $region44: #{dual_stgcn_forward.1} parent=1 // pred_region
      _
    $region45: #{dual_stgcn_forward.1} parent=1 // pred_fallthru
      _
    %1007 = vsyncpa [#allocation3], 1
    %1008 = vsyncpa [#allocation5], 1

</llo_original>
